<compile_context>
chip_gen: v5e
topology: v5e:2x2
jax: 0.10.0
libtpu: 0.0.40
codegen_flags: <defaults>
</compile_context>

<pallas_src>
import jax
import jax.numpy as jnp
import numpy as np
from jax.experimental import pallas as pl
from jax.experimental.pallas import tpu as pltpu

IMG_CHANNELS = 4
LATENT_SIZE = 4
BATCH = 8
LANE = 128  # TPU lane width; output slab + param slab are lane-dense


def _round8(n):
    return (n + 7) // 8 * 8


# Layer order: enc fc1, enc fc2, enc fc3, enc (fc_mu|fc_logsigma fused),
#              dec fc1, dec fc2, dec fc3, dec fc4
_LAYER_DIMS = [
    (IMG_CHANNELS, 16),
    (16, 16),
    (16, 8),
    (8, 2 * LATENT_SIZE),     # mu | logsigma fused along the output axis
    (LATENT_SIZE, 8),
    (8, 16),
    (16, 16),
    (16, IMG_CHANNELS),
]

# Per-layer row offsets inside the packed slab, 8-sublane aligned.
# Each layer occupies rows [off : off + in_f] for the weight ([in, out] layout)
# and row [off + in_f] for the bias.
_OFFSETS = []
_r = 0
for _fi, _fo in _LAYER_DIMS:
    _OFFSETS.append(_r)
    _r += _round8(_fi + 1)
R_TOTAL = _r  # = 144 rows -> 72 KiB f32 slab


def vae_kernel(x_ref, eps_ref, p_ref, out_ref):
    P = p_ref[...]          # [R_TOTAL, 128] packed weights+biases (VMEM resident)
    x = x_ref[...]          # [BM, IMG_CHANNELS]
    eps = eps_ref[...]      # [BM, LATENT_SIZE]

    def layer(h, idx):
        fi, fo = _LAYER_DIMS[idx]
        off = _OFFSETS[idx]
        w = P[off:off + fi, :fo]                 # [fi, fo]
        b = P[off + fi:off + fi + 1, :fo]        # [1, fo]
        return jnp.dot(h, w, preferred_element_type=jnp.float32) + b

    # ---- Encoder ----
    h = jax.nn.relu(layer(x, 0))                 # [BM, 16]
    h = jax.nn.relu(layer(h, 1))                 # [BM, 16]
    h = jax.nn.relu(layer(h, 2))                 # [BM, 8]
    ml = layer(h, 3)                             # [BM, 2L]  (mu | logsigma)
    mu = ml[:, :LATENT_SIZE]
    logsigma = ml[:, LATENT_SIZE:2 * LATENT_SIZE]

    # ---- Reparameterization: z = eps * exp(logsigma) + mu ----
    z = eps * jnp.exp(logsigma) + mu             # [BM, L]

    # ---- Decoder ----
    d = jax.nn.relu(layer(z, 4))                 # [BM, 8]
    d = jax.nn.relu(layer(d, 5))                 # [BM, 16]
    d = jax.nn.relu(layer(d, 6))                 # [BM, 16]
    recon = jnp.tanh(layer(d, 7))                # [BM, C]

    # ---- Single lane-dense output slab: [recon | mu | logsigma | 0-pad] ----
    bm = recon.shape[0]
    used = IMG_CHANNELS + 2 * LATENT_SIZE
    pad = jnp.zeros((bm, LANE - used), jnp.float32)
    out_ref[...] = jnp.concatenate([recon, mu, logsigma, pad], axis=1)


def init_linear(key, in_f, out_f):
    """PyTorch nn.Linear default init (uniform in +/- 1/sqrt(in_f)).
    Weight is stored transposed as [in, out]; bias as [1, out]."""
    k_w, k_b = jax.random.split(key)
    bound = 1.0 / np.sqrt(in_f)
    w = jax.random.uniform(k_w, (in_f, out_f), jnp.float32, -bound, bound)
    b = jax.random.uniform(k_b, (1, out_f), jnp.float32, -bound, bound)
    return w, b


def init_vae_params(key, img_channels, latent_size):
    keys = jax.random.split(key, 9)
    params = []
    # Encoder: fc1, fc2, fc3, fc_mu, fc_logsigma
    params += init_linear(keys[0], img_channels, 16)
    params += init_linear(keys[1], 16, 16)
    params += init_linear(keys[2], 16, 8)
    params += init_linear(keys[3], 8, latent_size)
    params += init_linear(keys[4], 8, latent_size)
    # Decoder: fc1, fc2, fc3, fc4
    params += init_linear(keys[5], latent_size, 8)
    params += init_linear(keys[6], 8, 16)
    params += init_linear(keys[7], 16, 16)
    params += init_linear(keys[8], 16, img_channels)
    return params


def pack_vae_params(params):
    """Pack all weights + biases into one [R_TOTAL, 128] slab (done ONCE)."""
    (we1, be1, we2, be2, we3, be3, wmu, bmu, wls, bls,
     wd1, bd1, wd2, bd2, wd3, bd3, wd4, bd4) = params
    # Fuse fc_mu | fc_logsigma along the output axis.
    wml = jnp.concatenate([wmu, wls], axis=1)    # [8, 2L]
    bml = jnp.concatenate([bmu, bls], axis=1)    # [1, 2L]
    layers = [(we1, be1), (we2, be2), (we3, be3), (wml, bml),
              (wd1, bd1), (wd2, bd2), (wd3, bd3), (wd4, bd4)]
    slab = jnp.zeros((R_TOTAL, LANE), jnp.float32)
    for (w, b), off in zip(layers, _OFFSETS):
        fi, fo = w.shape
        slab = slab.at[off:off + fi, :fo].set(w)
        slab = slab.at[off + fi, :fo].set(b[0])
    return slab


def vae_forward(x, eps, packed_params):
    B = x.shape[0]
    C, L = IMG_CHANNELS, LATENT_SIZE

    # Batch blocking: multiple of 8 sublanes; big blocks when batch is big.
    B8 = _round8(B)
    BM = min(B8, 512)
    B_pad = pl.cdiv(B8, BM) * BM
    if B_pad != B:
        x = jnp.pad(x, ((0, B_pad - B), (0, 0)))
        eps = jnp.pad(eps, ((0, B_pad - B), (0, 0)))

    grid = (B_pad // BM,)
    out = pl.pallas_call(
        vae_kernel,
        out_shape=jax.ShapeDtypeStruct((B_pad, LANE), jnp.float32),
        grid_spec=pltpu.PrefetchScalarGridSpec(
            num_scalar_prefetch=0,
            grid=grid,
            in_specs=[
                pl.BlockSpec((BM, C), lambda i: (i, 0)),        # x
                pl.BlockSpec((BM, L), lambda i: (i, 0)),        # eps
                pl.BlockSpec((R_TOTAL, LANE), lambda i: (0, 0)) # packed params (resident)
            ],
            out_specs=pl.BlockSpec((BM, LANE), lambda i: (i, 0)),
        ),
        compiler_params=pltpu.CompilerParams(
            dimension_semantics=("parallel",)),
    )(x, eps, packed_params)

    recon = out[:B, :C]
    mu = out[:B, C:C + L]
    logsigma = out[:B, C + L:C + 2 * L]
    return recon, mu, logsigma


def vae_forward_ref(x, eps, params):
    """Pure-JAX reference matching the PyTorch forward semantics."""
    (we1, be1, we2, be2, we3, be3, wmu, bmu, wls, bls,
     wd1, bd1, wd2, bd2, wd3, bd3, wd4, bd4) = params
    h = jax.nn.relu(x @ we1 + be1)
    h = jax.nn.relu(h @ we2 + be2)
    h = jax.nn.relu(h @ we3 + be3)
    mu = h @ wmu + bmu
    logsigma = h @ wls + bls
    z = eps * jnp.exp(logsigma) + mu
    d = jax.nn.relu(z @ wd1 + bd1)
    d = jax.nn.relu(d @ wd2 + bd2)
    d = jax.nn.relu(d @ wd3 + bd3)
    recon = jnp.tanh(d @ wd4 + bd4)
    return recon, mu, logsigma


if __name__ == "__main__":
    key = jax.random.PRNGKey(0)
    k_x, k_eps, k_params = jax.random.split(key, 3)

    x = jax.random.normal(k_x, (BATCH, IMG_CHANNELS), jnp.float32)
    # torch.randn_like(sigma) equivalent, sampled in the wrapper for determinism
    eps = jax.random.normal(k_eps, (BATCH, LATENT_SIZE), jnp.float32)
    params = init_vae_params(k_params, IMG_CHANNELS, LATENT_SIZE)
    packed = pack_vae_params(params)   # one-time parameter packing

    recon, mu, logsigma = jax.block_until_ready(vae_forward(x, eps, packed))

    recon_r, mu_r, logsigma_r = vae_forward_ref(x, eps, params)
    np.testing.assert_allclose(np.asarray(recon), np.asarray(recon_r), rtol=1e-5, atol=1e-5)
    np.testing.assert_allclose(np.asarray(mu), np.asarray(mu_r), rtol=1e-5, atol=1e-5)
    np.testing.assert_allclose(np.asarray(logsigma), np.asarray(logsigma_r), rtol=1e-5, atol=1e-5)

    print("KERNEL_OK")
</pallas_src>

<mosaic_0001>
module attributes {stable_mosaic.version = 11 : i64} {
  func.func @vae_kernel(%arg0: i32, %arg1: memref<8x4xf32, #tpu.memory_space<vmem>>, %arg2: memref<8x4xf32, #tpu.memory_space<vmem>>, %arg3: memref<144x128xf32, #tpu.memory_space<vmem>>, %arg4: memref<8x128xf32, #tpu.memory_space<vmem>>) attributes {dimension_semantics = [#tpu.dimension_semantics<parallel>], iteration_bounds = array<i64: 1>, scalar_prefetch = 0 : i64, scratch_operands = 0 : i64, tpu.core_type = #tpu.core_type<tc>, window_params = [{transform_indices = @transform_0, window_bounds = array<i64: 8, 4>}, {transform_indices = @transform_1, window_bounds = array<i64: 8, 4>}, {pipeline_mode = #tpu.pipeline_mode<synchronous>, transform_indices = @transform_2, window_bounds = array<i64: 144, 128>}, {transform_indices = @transform_3, window_bounds = array<i64: 8, 128>}]} {
    %c0 = arith.constant 0 : index
    %c0_0 = arith.constant 0 : index
    %0 = vector.load %arg3[%c0, %c0_0] : memref<144x128xf32, #tpu.memory_space<vmem>>, vector<144x128xf32>
    %c0_1 = arith.constant 0 : index
    %c0_2 = arith.constant 0 : index
    %1 = vector.load %arg1[%c0_1, %c0_2] : memref<8x4xf32, #tpu.memory_space<vmem>>, vector<8x4xf32>
    %c0_3 = arith.constant 0 : index
    %c0_4 = arith.constant 0 : index
    %2 = vector.load %arg2[%c0_3, %c0_4] : memref<8x4xf32, #tpu.memory_space<vmem>>, vector<8x4xf32>
    %3 = vector.extract_strided_slice %0 {offsets = [0, 0], sizes = [4, 16], strides = [1, 1]} : vector<144x128xf32> to vector<4x16xf32>
    %4 = vector.extract_strided_slice %0 {offsets = [4, 0], sizes = [1, 16], strides = [1, 1]} : vector<144x128xf32> to vector<1x16xf32>
    %cst = arith.constant dense<0.000000e+00> : vector<8x16xf32>
    %5 = tpu.matmul %1, %3, %cst {dimension_numbers = #tpu.dot_dimension_numbers<[1], [0], [0], [1], [0, 0, 1, 1], [], []>} : vector<8x4xf32>, vector<4x16xf32>, vector<8x16xf32> -> vector<8x16xf32>
    %6 = vector.broadcast %4 : vector<1x16xf32> to vector<8x16xf32>
    %7 = arith.addf %5, %6 : vector<8x16xf32>
    %cst_5 = arith.constant 0.000000e+00 : f32
    %8 = vector.broadcast %cst_5 : f32 to vector<8x16xf32>
    %9 = arith.maximumf %7, %8 : vector<8x16xf32>
    %10 = vector.extract_strided_slice %0 {offsets = [8, 0], sizes = [16, 16], strides = [1, 1]} : vector<144x128xf32> to vector<16x16xf32>
    %11 = vector.extract_strided_slice %0 {offsets = [24, 0], sizes = [1, 16], strides = [1, 1]} : vector<144x128xf32> to vector<1x16xf32>
    %cst_6 = arith.constant dense<0.000000e+00> : vector<8x16xf32>
    %12 = tpu.matmul %9, %10, %cst_6 {dimension_numbers = #tpu.dot_dimension_numbers<[1], [0], [0], [1], [0, 0, 1, 1], [], []>} : vector<8x16xf32>, vector<16x16xf32>, vector<8x16xf32> -> vector<8x16xf32>
    %13 = vector.broadcast %11 : vector<1x16xf32> to vector<8x16xf32>
    %14 = arith.addf %12, %13 : vector<8x16xf32>
    %cst_7 = arith.constant 0.000000e+00 : f32
    %15 = vector.broadcast %cst_7 : f32 to vector<8x16xf32>
    %16 = arith.maximumf %14, %15 : vector<8x16xf32>
    %17 = vector.extract_strided_slice %0 {offsets = [32, 0], sizes = [16, 8], strides = [1, 1]} : vector<144x128xf32> to vector<16x8xf32>
    %18 = vector.extract_strided_slice %0 {offsets = [48, 0], sizes = [1, 8], strides = [1, 1]} : vector<144x128xf32> to vector<1x8xf32>
    %cst_8 = arith.constant dense<0.000000e+00> : vector<8x8xf32>
    %19 = tpu.matmul %16, %17, %cst_8 {dimension_numbers = #tpu.dot_dimension_numbers<[1], [0], [0], [1], [0, 0, 1, 1], [], []>} : vector<8x16xf32>, vector<16x8xf32>, vector<8x8xf32> -> vector<8x8xf32>
    %20 = vector.broadcast %18 : vector<1x8xf32> to vector<8x8xf32>
    %21 = arith.addf %19, %20 : vector<8x8xf32>
    %cst_9 = arith.constant 0.000000e+00 : f32
    %22 = vector.broadcast %cst_9 : f32 to vector<8x8xf32>
    %23 = arith.maximumf %21, %22 : vector<8x8xf32>
    %24 = vector.extract_strided_slice %0 {offsets = [56, 0], sizes = [8, 8], strides = [1, 1]} : vector<144x128xf32> to vector<8x8xf32>
    %25 = vector.extract_strided_slice %0 {offsets = [64, 0], sizes = [1, 8], strides = [1, 1]} : vector<144x128xf32> to vector<1x8xf32>
    %cst_10 = arith.constant dense<0.000000e+00> : vector<8x8xf32>
    %26 = tpu.matmul %23, %24, %cst_10 {dimension_numbers = #tpu.dot_dimension_numbers<[1], [0], [0], [1], [0, 0, 1, 1], [], []>} : vector<8x8xf32>, vector<8x8xf32>, vector<8x8xf32> -> vector<8x8xf32>
    %27 = vector.broadcast %25 : vector<1x8xf32> to vector<8x8xf32>
    %28 = arith.addf %26, %27 : vector<8x8xf32>
    %29 = vector.extract_strided_slice %28 {offsets = [0, 0], sizes = [8, 4], strides = [1, 1]} : vector<8x8xf32> to vector<8x4xf32>
    %30 = vector.extract_strided_slice %28 {offsets = [0, 4], sizes = [8, 4], strides = [1, 1]} : vector<8x8xf32> to vector<8x4xf32>
    %31 = math.exp %30 : vector<8x4xf32>
    %32 = arith.mulf %2, %31 : vector<8x4xf32>
    %33 = arith.addf %32, %29 : vector<8x4xf32>
    %34 = vector.extract_strided_slice %0 {offsets = [72, 0], sizes = [4, 8], strides = [1, 1]} : vector<144x128xf32> to vector<4x8xf32>
    %35 = vector.extract_strided_slice %0 {offsets = [76, 0], sizes = [1, 8], strides = [1, 1]} : vector<144x128xf32> to vector<1x8xf32>
    %cst_11 = arith.constant dense<0.000000e+00> : vector<8x8xf32>
    %36 = tpu.matmul %33, %34, %cst_11 {dimension_numbers = #tpu.dot_dimension_numbers<[1], [0], [0], [1], [0, 0, 1, 1], [], []>} : vector<8x4xf32>, vector<4x8xf32>, vector<8x8xf32> -> vector<8x8xf32>
    %37 = vector.broadcast %35 : vector<1x8xf32> to vector<8x8xf32>
    %38 = arith.addf %36, %37 : vector<8x8xf32>
    %cst_12 = arith.constant 0.000000e+00 : f32
    %39 = vector.broadcast %cst_12 : f32 to vector<8x8xf32>
    %40 = arith.maximumf %38, %39 : vector<8x8xf32>
    %41 = vector.extract_strided_slice %0 {offsets = [80, 0], sizes = [8, 16], strides = [1, 1]} : vector<144x128xf32> to vector<8x16xf32>
    %42 = vector.extract_strided_slice %0 {offsets = [88, 0], sizes = [1, 16], strides = [1, 1]} : vector<144x128xf32> to vector<1x16xf32>
    %cst_13 = arith.constant dense<0.000000e+00> : vector<8x16xf32>
    %43 = tpu.matmul %40, %41, %cst_13 {dimension_numbers = #tpu.dot_dimension_numbers<[1], [0], [0], [1], [0, 0, 1, 1], [], []>} : vector<8x8xf32>, vector<8x16xf32>, vector<8x16xf32> -> vector<8x16xf32>
    %44 = vector.broadcast %42 : vector<1x16xf32> to vector<8x16xf32>
    %45 = arith.addf %43, %44 : vector<8x16xf32>
    %cst_14 = arith.constant 0.000000e+00 : f32
    %46 = vector.broadcast %cst_14 : f32 to vector<8x16xf32>
    %47 = arith.maximumf %45, %46 : vector<8x16xf32>
    %48 = vector.extract_strided_slice %0 {offsets = [96, 0], sizes = [16, 16], strides = [1, 1]} : vector<144x128xf32> to vector<16x16xf32>
    %49 = vector.extract_strided_slice %0 {offsets = [112, 0], sizes = [1, 16], strides = [1, 1]} : vector<144x128xf32> to vector<1x16xf32>
    %cst_15 = arith.constant dense<0.000000e+00> : vector<8x16xf32>
    %50 = tpu.matmul %47, %48, %cst_15 {dimension_numbers = #tpu.dot_dimension_numbers<[1], [0], [0], [1], [0, 0, 1, 1], [], []>} : vector<8x16xf32>, vector<16x16xf32>, vector<8x16xf32> -> vector<8x16xf32>
    %51 = vector.broadcast %49 : vector<1x16xf32> to vector<8x16xf32>
    %52 = arith.addf %50, %51 : vector<8x16xf32>
    %cst_16 = arith.constant 0.000000e+00 : f32
    %53 = vector.broadcast %cst_16 : f32 to vector<8x16xf32>
    %54 = arith.maximumf %52, %53 : vector<8x16xf32>
    %55 = vector.extract_strided_slice %0 {offsets = [120, 0], sizes = [16, 4], strides = [1, 1]} : vector<144x128xf32> to vector<16x4xf32>
    %56 = vector.extract_strided_slice %0 {offsets = [136, 0], sizes = [1, 4], strides = [1, 1]} : vector<144x128xf32> to vector<1x4xf32>
    %cst_17 = arith.constant dense<0.000000e+00> : vector<8x4xf32>
    %57 = tpu.matmul %54, %55, %cst_17 {dimension_numbers = #tpu.dot_dimension_numbers<[1], [0], [0], [1], [0, 0, 1, 1], [], []>} : vector<8x16xf32>, vector<16x4xf32>, vector<8x4xf32> -> vector<8x4xf32>
    %58 = vector.broadcast %56 : vector<1x4xf32> to vector<8x4xf32>
    %59 = arith.addf %57, %58 : vector<8x4xf32>
    %60 = math.tanh %59 : vector<8x4xf32>
    %cst_18 = arith.constant 0.000000e+00 : f32
    %61 = vector.broadcast %cst_18 : f32 to vector<8x116xf32>
    %62 = tpu.concatenate %60, %29, %30, %61 in 1 : vector<8x4xf32>, vector<8x4xf32>, vector<8x4xf32>, vector<8x116xf32> -> vector<8x128xf32>
    %c0_19 = arith.constant 0 : index
    %c0_20 = arith.constant 0 : index
    %63 = vector.load %arg4[%c0_19, %c0_20] : memref<8x128xf32, #tpu.memory_space<vmem>>, vector<8x128xf32>
    tpu.vector_store %arg4[%c0_19, %c0_20], %62 {strides = array<i32>} : memref<8x128xf32, #tpu.memory_space<vmem>>, vector<8x128xf32>,
    return
  }
  func.func @transform_0(%arg0: i32) -> (i32, i32) {
    %c0_i32 = arith.constant 0 : i32
    %c0_i32_0 = arith.constant 0 : i32
    return %arg0, %c0_i32 : i32, i32
  }
  func.func @transform_1(%arg0: i32) -> (i32, i32) {
    %c0_i32 = arith.constant 0 : i32
    %c0_i32_0 = arith.constant 0 : i32
    return %arg0, %c0_i32 : i32, i32
  }
  func.func @transform_2(%arg0: i32) -> (i32, i32) {
    %c0_i32 = arith.constant 0 : i32
    %c0_i32_0 = arith.constant 0 : i32
    %c0_i32_1 = arith.constant 0 : i32
    return %c0_i32, %c0_i32_0 : i32, i32
  }
  func.func @transform_3(%arg0: i32) -> (i32, i32) {
    %c0_i32 = arith.constant 0 : i32
    %c0_i32_0 = arith.constant 0 : i32
    return %arg0, %c0_i32 : i32, i32
  }
}

</mosaic_0001>

<llo_original>
// kernel: tpu_custom_call.1
$region0: #{tpu_custom_call.1}
  #allocation0 [shape = 'u32[]', space=smem, size = 0x4, offset = 0x4, fixed_abs, tag = 'smem constant byte address 0x4 - core index']
  #allocation1 [shape = 'u32[72,128]{1,0:T(1,128)}', space=vmem, size = 0x9000, scoped, tag = 'internal scratch']
  %s0 = inlined_call_operand.vmem [shape: f32[8,4], index: 0, kind: input, shape index: {}]
  %s1 = inlined_call_operand.vmem [shape: f32[8,4], index: 1, kind: input, shape index: {}]
  %s2 = inlined_call_operand.hbm [shape: f32[144,128], index: 2, kind: input, shape index: {}]
  %s3 = inlined_call_operand.hbm [shape: f32[8,128], index: 3, kind: output, shape index: {}]
  %s4 = sld [smem:[#allocation0]]
  $region26: #{tpu_custom_call.1} parent=0
    _
  %s6 = ssub.s32 1, %s4
  %s7 = scalar_select 0, %s6, %s4
  $region1: #{tpu_custom_call.1} parent=0
    #allocation2 [shape = 'u8[73728]{0}', space=vmem, size = 0x12000, scoped, tag = 'input window, operand 2, single buffered']
    #allocation3 [shape = 's32[1]{0}', space=sflag, size = 0x4, scoped, tag = 'scoped memory for tpu_custom_call.1']
    #allocation4 [shape = 's32[1]{0}', space=sflag, size = 0x4, scoped, tag = 'scoped memory for tpu_custom_call.1']
    #allocation5 [shape = 'u8[4096]{0}', space=vmem, size = 0x1000, scoped, tag = 'output window, operand 0, single buffered']
    %8 = vsyncpa [#allocation3], 0
    %9 = vsyncpa [#allocation4], 0
    // Predicated region
    $region2: #{tpu_custom_call.1} parent=1 // pred_check
      _
    $region3: #{tpu_custom_call.1} parent=1 // pred_check_branch
      %11 = sbr.rel (0) target = $region5
    $region4: #{tpu_custom_call.1} parent=1 // pred_region
      _
    $region5: #{tpu_custom_call.1} parent=1 // pred_fallthru
      _
    // Predicated region
    $region6: #{tpu_custom_call.1} parent=1 // pred_check
      _
    $region7: #{tpu_custom_call.1} parent=1 // pred_check_branch
      %13 = sbr.rel (0) target = $region9
    $region8: #{tpu_custom_call.1} parent=1 // pred_region
      _
    $region9: #{tpu_custom_call.1} parent=1 // pred_fallthru
      _
    // Predicated region
    $region10: #{tpu_custom_call.1} parent=1 // pred_check
      _
    $region11: #{tpu_custom_call.1} parent=1 // pred_check_branch
      %15 = sbr.rel (0) target = $region13
    $region12: #{tpu_custom_call.1} parent=1 // pred_region
      %17 = vsyncadd [#allocation3], 0
      %s18 = sshll.u32 %s2, 4
      %s19 = int_to_ptr.hbm [resolvable:$true] %s18
      %s20 = sshll.u32 [#allocation2], 4
      %s21 = int_to_ptr.vmem [resolvable:$true] %s20
      %26 = dma.hbm_to_vmem [thread:$0]  %s19, 2304, %s21, [#allocation3], 128, 128, 8
    $region13: #{tpu_custom_call.1} parent=1 // pred_fallthru
      _
    // Predicated region
    $region14: #{tpu_custom_call.1} parent=1 // pred_check
      _
    $region15: #{tpu_custom_call.1} parent=1 // pred_check_branch
      %28 = sbr.rel (0) target = $region17
    $region16: #{tpu_custom_call.1} parent=1 // pred_region
      %30 = dma.done [#allocation3], 2304
    $region17: #{tpu_custom_call.1} parent=1 // pred_fallthru
      _
    %v31 = vld [vmem:[#allocation2] sm:$0xff]
    %v32 = vld [vmem:[#allocation2 + $0x8] sm:$0xff]
    %v33 = vld [vmem:[#allocation2 + $0x10] sm:$0xff]
    %v34 = vld [vmem:[#allocation2 + $0x18] sm:$0xff]
    %v35 = vld [vmem:[#allocation2 + $0x20] sm:$0xff]
    %v36 = vld [vmem:[#allocation2 + $0x28] sm:$0xff]
    %v37 = vld [vmem:[#allocation2 + $0x30] sm:$0xff]
    %v38 = vld [vmem:[#allocation2 + $0x38] sm:$0xff]
    %v39 = vld [vmem:[#allocation2 + $0x40] sm:$0xff]
    %v40 = vld [vmem:[#allocation2 + $0x48] sm:$0xff]
    %v41 = vld [vmem:[#allocation2 + $0x50] sm:$0xff]
    %v42 = vld [vmem:[#allocation2 + $0x58] sm:$0xff]
    %v43 = vld [vmem:[#allocation2 + $0x60] sm:$0xff]
    %v44 = vld [vmem:[#allocation2 + $0x68] sm:$0xff]
    %v45 = vld [vmem:[#allocation2 + $0x70] sm:$0xff]
    %v46 = vld [vmem:[#allocation2 + $0x78] sm:$0xff]
    %v47 = vld [vmem:[#allocation2 + $0x80] sm:$0xff]
    %v48 = vld [vmem:[#allocation2 + $0x88] sm:$0xff]
    %v49 = vld [vmem:[%s0] sm:$0xff]
    %v50 = vld [vmem:[%s1] sm:$0xff]
    %v51 = vperm.slane %v31, 4
    %vm52 = vcmask 31744
    %v54 = vsel %vm52, %v49, 0
    %vm56 = vcmask 1043456
    %v58 = vsel %vm56, %v31, 0
    %60 = vmatpush.msra.mxu0 0.0
    %61 = vmatpush.msra.mxu0 0.0
    %62 = vmatpush.msra.mxu0 0.0
    %63 = vmatpush.msra.mxu0 0.0
    %64 = vmatpush.msra.mxu0 0.0
    %65 = vmatpush.msra.mxu0 0.0
    %66 = vmatpush.msra.mxu0 0.0
    %67 = vmatpush.msra.mxu0 0.0
    %68 = vmatpush.msra.mxu0 0.0
    %69 = vmatpush.msra.mxu0 0.0
    %70 = vmatpush.msra.mxu0 0.0
    %71 = vmatpush.msra.mxu0 0.0
    %72 = vmatpush.msra.mxu0 0.0
    %73 = vmatpush.msra.mxu0 0.0
    %74 = vmatpush.msra.mxu0 0.0
    %75 = vmatpush.msra.mxu0 %v58
    %76 = vmatmul.f32.gmra.mxu0 %v54
    %v77 = vpop.f32.mrf.mxu0
    %v78 = vadd.f32 %v51, %v77
    %79 = vdwg.mxu0
    %v80 = vmax.f32 %v78, 0.0
    %v81 = vperm.slane %v34, 0
    %vm82 = vcmask 130048
    %v84 = vsel %vm82, %v80, 0
    %86 = vmatpush.msra.mxu0 0.0
    %87 = vmatpush.msra.mxu0 0.0
    %88 = vmatpush.msra.mxu0 0.0
    %89 = vmatpush.msra.mxu0 0.0
    %90 = vmatpush.msra.mxu0 0.0
    %91 = vmatpush.msra.mxu0 0.0
    %92 = vmatpush.msra.mxu0 0.0
    %93 = vmatpush.msra.mxu0 0.0
    %94 = vmatpush.msra.mxu0 0.0
    %95 = vmatpush.msra.mxu0 0.0
    %96 = vmatpush.msra.mxu0 0.0
    %97 = vmatpush.msra.mxu0 0.0
    %98 = vmatpush.msra.mxu0 0.0
    %99 = vmatpush.msra.mxu0 0.0
    %100 = vmatpush.msra.mxu0 %v33
    %101 = vmatpush.msra.mxu0 %v32
    %102 = vmatmul.f32.gmra.mxu0 %v84
    %v103 = vpop.f32.mrf.mxu0
    %v104 = vadd.f32 %v81, %v103
    %105 = vdwg.mxu0
    %v106 = vmax.f32 %v104, 0.0
    %v107 = vperm.slane %v37, 0
    %v109 = vsel %vm82, %v106, 0
    %111 = vmatpush.msra.mxu0 0.0
    %112 = vmatpush.msra.mxu0 0.0
    %113 = vmatpush.msra.mxu0 0.0
    %114 = vmatpush.msra.mxu0 0.0
    %115 = vmatpush.msra.mxu0 0.0
    %116 = vmatpush.msra.mxu0 0.0
    %117 = vmatpush.msra.mxu0 0.0
    %118 = vmatpush.msra.mxu0 0.0
    %119 = vmatpush.msra.mxu0 0.0
    %120 = vmatpush.msra.mxu0 0.0
    %121 = vmatpush.msra.mxu0 0.0
    %122 = vmatpush.msra.mxu0 0.0
    %123 = vmatpush.msra.mxu0 0.0
    %124 = vmatpush.msra.mxu0 0.0
    %125 = vmatpush.msra.mxu0 %v36
    %126 = vmatpush.msra.mxu0 %v35
    %127 = vmatmul.f32.gmra.mxu0 %v109
    %v128 = vpop.f32.mrf.mxu0
    %v129 = vadd.f32 %v107, %v128
    %130 = vdwg.mxu0
    %v131 = vmax.f32 %v129, 0.0
    %v132 = vperm.slane %v39, 0
    %vm133 = vcmask 64512
    %v135 = vsel %vm133, %v131, 0
    %137 = vmatpush.msra.mxu0 0.0
    %138 = vmatpush.msra.mxu0 0.0
    %139 = vmatpush.msra.mxu0 0.0
    %140 = vmatpush.msra.mxu0 0.0
    %141 = vmatpush.msra.mxu0 0.0
    %142 = vmatpush.msra.mxu0 0.0
    %143 = vmatpush.msra.mxu0 0.0
    %144 = vmatpush.msra.mxu0 0.0
    %145 = vmatpush.msra.mxu0 0.0
    %146 = vmatpush.msra.mxu0 0.0
    %147 = vmatpush.msra.mxu0 0.0
    %148 = vmatpush.msra.mxu0 0.0
    %149 = vmatpush.msra.mxu0 0.0
    %150 = vmatpush.msra.mxu0 0.0
    %151 = vmatpush.msra.mxu0 0.0
    %152 = vmatpush.msra.mxu0 %v38
    %153 = vmatmul.f32.gmra.mxu0 %v135
    %v154 = vpop.f32.mrf.mxu0
    %v155 = vadd.f32 %v132, %v154
    %156 = vdwg.mxu0
    %v157 = vmul.f32 %v155, 1.442695
    %v158 = vpow.pop %v157
    %160 = vrot.lane.b32.xlu0 %v158, 124
    %v161 = vpop.permute.xlu0 %160
    %v163 = vmul.f32 %v50, %v161
    %v164 = vadd.f32 %v163, %v155
    %v165 = vperm.slane %v40, 4
    %v167 = vsel %vm52, %v164, 0
    %v170 = vsel %vm56, %v40, 0
    %172 = vmatpush.msra.mxu0 0.0
    %173 = vmatpush.msra.mxu0 0.0
    %174 = vmatpush.msra.mxu0 0.0
    %175 = vmatpush.msra.mxu0 0.0
    %176 = vmatpush.msra.mxu0 0.0
    %177 = vmatpush.msra.mxu0 0.0
    %178 = vmatpush.msra.mxu0 0.0
    %179 = vmatpush.msra.mxu0 0.0
    %180 = vmatpush.msra.mxu0 0.0
    %181 = vmatpush.msra.mxu0 0.0
    %182 = vmatpush.msra.mxu0 0.0
    %183 = vmatpush.msra.mxu0 0.0
    %184 = vmatpush.msra.mxu0 0.0
    %185 = vmatpush.msra.mxu0 0.0
    %186 = vmatpush.msra.mxu0 0.0
    %187 = vmatpush.msra.mxu0 %v170
    %188 = vmatmul.f32.gmra.mxu0 %v167
    %v189 = vpop.f32.mrf.mxu0
    %v190 = vadd.f32 %v165, %v189
    %191 = vdwg.mxu0
    %v192 = vmax.f32 %v190, 0.0
    %v193 = vperm.slane %v42, 0
    %v195 = vsel %vm133, %v192, 0
    %197 = vmatpush.msra.mxu0 0.0
    %198 = vmatpush.msra.mxu0 0.0
    %199 = vmatpush.msra.mxu0 0.0
    %200 = vmatpush.msra.mxu0 0.0
    %201 = vmatpush.msra.mxu0 0.0
    %202 = vmatpush.msra.mxu0 0.0
    %203 = vmatpush.msra.mxu0 0.0
    %204 = vmatpush.msra.mxu0 0.0
    %205 = vmatpush.msra.mxu0 0.0
    %206 = vmatpush.msra.mxu0 0.0
    %207 = vmatpush.msra.mxu0 0.0
    %208 = vmatpush.msra.mxu0 0.0
    %209 = vmatpush.msra.mxu0 0.0
    %210 = vmatpush.msra.mxu0 0.0
    %211 = vmatpush.msra.mxu0 0.0
    %212 = vmatpush.msra.mxu0 %v41
    %213 = vmatmul.f32.gmra.mxu0 %v195
    %v214 = vpop.f32.mrf.mxu0
    %v215 = vadd.f32 %v193, %v214
    %216 = vdwg.mxu0
    %v217 = vmax.f32 %v215, 0.0
    %v218 = vperm.slane %v45, 0
    %v220 = vsel %vm82, %v217, 0
    %222 = vmatpush.msra.mxu0 0.0
    %223 = vmatpush.msra.mxu0 0.0
    %224 = vmatpush.msra.mxu0 0.0
    %225 = vmatpush.msra.mxu0 0.0
    %226 = vmatpush.msra.mxu0 0.0
    %227 = vmatpush.msra.mxu0 0.0
    %228 = vmatpush.msra.mxu0 0.0
    %229 = vmatpush.msra.mxu0 0.0
    %230 = vmatpush.msra.mxu0 0.0
    %231 = vmatpush.msra.mxu0 0.0
    %232 = vmatpush.msra.mxu0 0.0
    %233 = vmatpush.msra.mxu0 0.0
    %234 = vmatpush.msra.mxu0 0.0
    %235 = vmatpush.msra.mxu0 0.0
    %236 = vmatpush.msra.mxu0 %v44
    %237 = vmatpush.msra.mxu0 %v43
    %238 = vmatmul.f32.gmra.mxu0 %v220
    %v239 = vpop.f32.mrf.mxu0
    %v240 = vadd.f32 %v218, %v239
    %241 = vdwg.mxu0
    %v242 = vmax.f32 %v240, 0.0
    %v243 = vperm.slane %v48, 0
    %v245 = vsel %vm82, %v242, 0
    %247 = vmatpush.msra.mxu0 0.0
    %248 = vmatpush.msra.mxu0 0.0
    %249 = vmatpush.msra.mxu0 0.0
    %250 = vmatpush.msra.mxu0 0.0
    %251 = vmatpush.msra.mxu0 0.0
    %252 = vmatpush.msra.mxu0 0.0
    %253 = vmatpush.msra.mxu0 0.0
    %254 = vmatpush.msra.mxu0 0.0
    %255 = vmatpush.msra.mxu0 0.0
    %256 = vmatpush.msra.mxu0 0.0
    %257 = vmatpush.msra.mxu0 0.0
    %258 = vmatpush.msra.mxu0 0.0
    %259 = vmatpush.msra.mxu0 0.0
    %260 = vmatpush.msra.mxu0 0.0
    %261 = vmatpush.msra.mxu0 %v47
    %262 = vmatpush.msra.mxu0 %v46
    %263 = vmatmul.f32.gmra.mxu0 %v245
    %v264 = vpop.f32.mrf.mxu0
    %v265 = vadd.f32 %v243, %v264
    %266 = vdwg.mxu0
    %v267 = vtanh.pop %v265
    %269 = vrot.lane.b32.xlu0 %v155, 4
    %v270 = vpop.permute.xlu0 %269
    %v272 = vsel %vm52, %v267, %v270
    %v273 = vsel %vm133, %v272, %v270
    %vm274 = vcmask 97280
    %v275 = vsel %vm274, %v273, 0.0
    %276 = vst [vmem:[#allocation5] sm:$0xff] %v275
    // Predicated region
    $region18: #{tpu_custom_call.1} parent=1 // pred_check
      _
    $region19: #{tpu_custom_call.1} parent=1 // pred_check_branch
      %278 = sbr.rel (0) target = $region21
    $region20: #{tpu_custom_call.1} parent=1 // pred_region
      %280 = vsyncadd [#allocation4], 0
      %s282 = sshll.u32 [#allocation5], 4
      %s283 = int_to_ptr.vmem [resolvable:$true] %s282
      %s284 = sshll.u32 %s3, 4
      %s285 = int_to_ptr.hbm [resolvable:$true] %s284
      %287 = dma.vmem_to_hbm [thread:$0]  %s283, 128, %s285, [#allocation4]
    $region21: #{tpu_custom_call.1} parent=1 // pred_fallthru
      _
    // Predicated region
    $region22: #{tpu_custom_call.1} parent=1 // pred_check
      _
    $region23: #{tpu_custom_call.1} parent=1 // pred_check_branch
      %289 = sbr.rel (0) target = $region25
    $region24: #{tpu_custom_call.1} parent=1 // pred_region
      %291 = dma.done [#allocation4], 128
    $region25: #{tpu_custom_call.1} parent=1 // pred_fallthru
      _
    %292 = vsyncpa [#allocation3], 1
    %293 = vsyncpa [#allocation4], 1

</llo_original>
